<compile_context>
chip_gen: v7x
topology: tpu7x:2x2x1
jax: 0.10.0
libtpu: 0.0.40
codegen_flags: <defaults>
</compile_context>

<pallas_src>
import jax
import jax.numpy as jnp
from jax.experimental import pallas as pl
from jax.experimental.pallas import tpu as pltpu


def _round_up(x, m):
    return (x + m - 1) // m * m


def timm_forward_kernel(patch_ref, wconv_ref, bias_ref, whead_ref, bhead_ref,
                        out_ref, feat_acc):
    """One (image, row-tile) step of the fused classifier forward.

    patch_ref : [1, TR, KP]  im2col rows of this image/row-tile (K zero-padded)
    wconv_ref : [KP, FP]     conv weight with BN scale folded in (zero-padded)
    bias_ref  : [1, FP]      folded BN bias (incl. conv bias), zero-padded
    whead_ref : [FP, NCP]    classifier weight with 1/(H*W) pooling folded in
    bhead_ref : [1, NCP]     classifier bias, zero-padded
    out_ref   : [1, 8, NCP]  logits for this image, replicated on 8 sublanes
    feat_acc  : VMEM [1, FP] running column-sum of post-ReLU activations
    """
    r = pl.program_id(1)
    n_r = pl.num_programs(1)

    @pl.when(r == 0)
    def _():
        feat_acc[...] = jnp.zeros_like(feat_acc)

    # Conv-as-im2col matmul on the MXU: [TR, KP] @ [KP, FP] -> [TR, FP].
    y = jnp.dot(patch_ref[0], wconv_ref[...], preferred_element_type=jnp.float32)
    # Folded-BN bias + ReLU (scale already folded into wconv in the wrapper).
    y = jnp.maximum(y + bias_ref[...], 0.0)
    # Global-average-pool partial sum (the 1/(H*W) factor lives in whead).
    feat_acc[...] += jnp.sum(y, axis=0, keepdims=True)

    @pl.when(r == n_r - 1)
    def _():
        logits = jnp.dot(feat_acc[...], whead_ref[...],
                         preferred_element_type=jnp.float32) + bhead_ref[...]
        # Replicate across 8 sublanes -> one full (8, 128) unmasked store.
        out_ref[...] = jnp.broadcast_to(
            logits[:, None, :], out_ref.shape).astype(out_ref.dtype)


def timm_model_forward(x_nchw, params, *, row_tile=128):
    """Wrapper: layout glue (im2col, BN folding, padding) + pallas_call."""
    conv_w = params["conv_w"]          # [F, C, 3, 3]  (PyTorch OIHW)
    conv_b = params["conv_b"]          # [F]
    gamma, beta = params["bn_gamma"], params["bn_beta"]
    mean, var = params["bn_mean"], params["bn_var"]
    head_w = params["head_w"]          # [NC, F]       (PyTorch layout)
    head_b = params["head_b"]          # [NC]
    eps = 1e-5

    B, C, H, W = x_nchw.shape
    F = conv_w.shape[0]
    NC = head_w.shape[0]
    HW = H * W
    K = 9 * C
    KP = _round_up(K, 128)    # lane-dense contraction dim
    FP = _round_up(F, 128)    # lane-dense feature dim
    NCP = _round_up(NC, 128)  # lane-dense logits dim

    assert HW % row_tile == 0, "row_tile must divide H*W"
    n_rt = HW // row_tile

    # ---- glue: im2col (kh-major, kw, then C — matches weight reshape) ----
    x_nhwc = jnp.transpose(x_nchw, (0, 2, 3, 1)).astype(jnp.float32)
    x_pad = jnp.pad(x_nhwc, ((0, 0), (1, 1), (1, 1), (0, 0)))
    taps = [x_pad[:, kh:kh + H, kw:kw + W, :]
            for kh in range(3) for kw in range(3)]
    patches = jnp.concatenate(taps, axis=-1).reshape(B, HW, K)
    patches = jnp.pad(patches, ((0, 0), (0, 0), (0, KP - K)))

    # ---- glue: fold BN scale into conv weight, pooling factor into head ----
    scale = gamma / jnp.sqrt(var + eps)                       # [F]
    bias = beta - mean * scale + conv_b * scale               # [F]
    wk = jnp.transpose(conv_w, (2, 3, 1, 0)).reshape(K, F)    # [9*C, F]
    wk = wk * scale[None, :]
    wk = jnp.pad(wk, ((0, KP - K), (0, FP - F)))              # [KP, FP]
    bias2 = jnp.pad(bias, (0, FP - F)).reshape(1, FP)
    wh = jnp.transpose(head_w, (1, 0)) * (1.0 / HW)           # [F, NC] / HW
    wh = jnp.pad(wh, ((0, FP - F), (0, NCP - NC)))            # [FP, NCP]
    bh = jnp.pad(head_b, (0, NCP - NC)).reshape(1, NCP)

    out = pl.pallas_call(
        timm_forward_kernel,
        out_shape=jax.ShapeDtypeStruct((B, 8, NCP), jnp.float32),
        grid_spec=pltpu.PrefetchScalarGridSpec(
            num_scalar_prefetch=0,
            grid=(B, n_rt),
            in_specs=[
                pl.BlockSpec((1, row_tile, KP), lambda b, r: (b, r, 0)),
                pl.BlockSpec((KP, FP), lambda b, r: (0, 0)),
                pl.BlockSpec((1, FP), lambda b, r: (0, 0)),
                pl.BlockSpec((FP, NCP), lambda b, r: (0, 0)),
                pl.BlockSpec((1, NCP), lambda b, r: (0, 0)),
            ],
            out_specs=pl.BlockSpec((1, 8, NCP), lambda b, r: (b, 0, 0)),
            scratch_shapes=[pltpu.VMEM((1, FP), jnp.float32)],
        ),
        compiler_params=pltpu.CompilerParams(
            dimension_semantics=("parallel", "arbitrary"),
            vmem_limit_bytes=32 * 1024 * 1024,
        ),
    )(patches, wk, bias2, wh, bh)

    return out[:, 0, :NC]


def reference_forward(x_nchw, params):
    """Pure-JAX reference for correctness checking."""
    eps = 1e-5
    wconv, bconv = params["conv_w"], params["conv_b"]
    gamma, beta = params["bn_gamma"], params["bn_beta"]
    mean, var = params["bn_mean"], params["bn_var"]
    whead, bhead = params["head_w"], params["head_b"]
    y = jax.lax.conv_general_dilated(
        x_nchw, wconv, window_strides=(1, 1), padding="SAME",
        dimension_numbers=("NCHW", "OIHW", "NCHW"))
    y = y + bconv[None, :, None, None]
    y = (y - mean[None, :, None, None]) / jnp.sqrt(var[None, :, None, None] + eps)
    y = y * gamma[None, :, None, None] + beta[None, :, None, None]
    y = jnp.maximum(y, 0.0)
    feat = jnp.mean(y, axis=(2, 3))                # [B, F]
    return feat @ whead.T + bhead


if __name__ == "__main__":
    # Small shapes consistent with the module: batch=2, channels=4, 16x16 image.
    B, C, H, W = 2, 4, 16, 16
    F = 32          # hidden conv channels
    NC = 8          # num_classes

    key = jax.random.PRNGKey(0)
    ks = jax.random.split(key, 8)
    x = jax.random.normal(ks[0], (B, C, H, W), jnp.float32)

    params = {
        "conv_w": 0.1 * jax.random.normal(ks[1], (F, C, 3, 3), jnp.float32),
        "conv_b": 0.05 * jax.random.normal(ks[2], (F,), jnp.float32),
        "bn_gamma": 1.0 + 0.1 * jax.random.normal(ks[3], (F,), jnp.float32),
        "bn_beta": 0.1 * jax.random.normal(ks[4], (F,), jnp.float32),
        "bn_mean": 0.1 * jax.random.normal(ks[5], (F,), jnp.float32),
        "bn_var": jnp.abs(1.0 + 0.1 * jax.random.normal(ks[6], (F,), jnp.float32)),
        "head_w": 0.1 * jax.random.normal(ks[7], (NC, F), jnp.float32),
        "head_b": jnp.linspace(-0.1, 0.1, NC, dtype=jnp.float32),
    }

    logits = jax.block_until_ready(timm_model_forward(x, params))
    ref = jax.block_until_ready(reference_forward(x, params))
    assert logits.shape == (B, NC)
    assert jnp.allclose(logits, ref, atol=1e-3, rtol=1e-3), (logits, ref)
    print("KERNEL_OK")
</pallas_src>

<mosaic_0001>
module attributes {stable_mosaic.version = 11 : i64} {
  func.func @timm_forward_kernel(%arg0: i32, %arg1: i32, %arg2: memref<1x128x128xf32, #tpu.memory_space<vmem>>, %arg3: memref<128x128xf32, #tpu.memory_space<vmem>>, %arg4: memref<1x128xf32, #tpu.memory_space<vmem>>, %arg5: memref<128x128xf32, #tpu.memory_space<vmem>>, %arg6: memref<1x128xf32, #tpu.memory_space<vmem>>, %arg7: memref<1x8x128xf32, #tpu.memory_space<vmem>>, %arg8: memref<1x128xf32, #tpu.memory_space<vmem>>) attributes {dimension_semantics = [#tpu.dimension_semantics<parallel>, #tpu.dimension_semantics<arbitrary>], iteration_bounds = array<i64: 2, 2>, scalar_prefetch = 0 : i64, scratch_operands = 1 : i64, tpu.core_type = #tpu.core_type<tc>, window_params = [{transform_indices = @transform_0, window_bounds = array<i64: 1, 128, 128>}, {pipeline_mode = #tpu.pipeline_mode<synchronous>, transform_indices = @transform_1, window_bounds = array<i64: 128, 128>}, {pipeline_mode = #tpu.pipeline_mode<synchronous>, transform_indices = @transform_2, window_bounds = array<i64: 1, 128>}, {pipeline_mode = #tpu.pipeline_mode<synchronous>, transform_indices = @transform_3, window_bounds = array<i64: 128, 128>}, {pipeline_mode = #tpu.pipeline_mode<synchronous>, transform_indices = @transform_4, window_bounds = array<i64: 1, 128>}, {transform_indices = @transform_5, window_bounds = array<i64: 1, 8, 128>}]} {
    %c0_i32 = arith.constant 0 : i32
    %0 = arith.cmpi eq, %arg1, %c0_i32 : i32
    %1 = arith.extui %0 : i1 to i32
    %c0_i32_0 = arith.constant 0 : i32
    %2 = arith.cmpi ne, %1, %c0_i32_0 : i32
    scf.if %2 {
      %cst_14 = arith.constant 0.000000e+00 : f32
      %20 = vector.broadcast %cst_14 : f32 to vector<1x128xf32>
      %c0_15 = arith.constant 0 : index
      %c0_16 = arith.constant 0 : index
      %21 = vector.load %arg8[%c0_15, %c0_16] : memref<1x128xf32, #tpu.memory_space<vmem>>, vector<1x128xf32>
      tpu.vector_store %arg8[%c0_15, %c0_16], %20 {strides = array<i32>} : memref<1x128xf32, #tpu.memory_space<vmem>>, vector<1x128xf32>,
    } else {
    }
    %c0 = arith.constant 0 : index
    %c0_1 = arith.constant 0 : index
    %c0_2 = arith.constant 0 : index
    %3 = vector.load %arg2[%c0, %c0_1, %c0_2] : memref<1x128x128xf32, #tpu.memory_space<vmem>>, vector<1x128x128xf32>
    %4 = vector.shape_cast %3 : vector<1x128x128xf32> to vector<128x128xf32>
    %c0_3 = arith.constant 0 : index
    %c0_4 = arith.constant 0 : index
    %5 = vector.load %arg3[%c0_3, %c0_4] : memref<128x128xf32, #tpu.memory_space<vmem>>, vector<128x128xf32>
    %cst = arith.constant dense<0.000000e+00> : vector<128x128xf32>
    %6 = tpu.matmul %4, %5, %cst {dimension_numbers = #tpu.dot_dimension_numbers<[1], [0], [0], [1], [0, 0, 1, 1], [], []>} : vector<128x128xf32>, vector<128x128xf32>, vector<128x128xf32> -> vector<128x128xf32>
    %c0_5 = arith.constant 0 : index
    %c0_6 = arith.constant 0 : index
    %7 = vector.load %arg4[%c0_5, %c0_6] : memref<1x128xf32, #tpu.memory_space<vmem>>, vector<1x128xf32>
    %8 = vector.broadcast %7 : vector<1x128xf32> to vector<128x128xf32>
    %9 = arith.addf %6, %8 : vector<128x128xf32>
    %cst_7 = arith.constant 0.000000e+00 : f32
    %10 = vector.broadcast %cst_7 : f32 to vector<128x128xf32>
    %11 = arith.maximumf %9, %10 : vector<128x128xf32>
    %c0_8 = arith.constant 0 : index
    %c0_9 = arith.constant 0 : index
    %12 = vector.load %arg8[%c0_8, %c0_9] : memref<1x128xf32, #tpu.memory_space<vmem>>, vector<1x128xf32>
    %cst_10 = arith.constant dense<0.000000e+00> : vector<128xf32>
    %13 = vector.multi_reduction <add>, %11, %cst_10 [0] : vector<128x128xf32> to vector<128xf32>
    %14 = vector.shape_cast %13 : vector<128xf32> to vector<1x128xf32>
    %15 = arith.addf %12, %14 : vector<1x128xf32>
    %c0_11 = arith.constant 0 : index
    %c0_12 = arith.constant 0 : index
    %16 = vector.load %arg8[%c0_11, %c0_12] : memref<1x128xf32, #tpu.memory_space<vmem>>, vector<1x128xf32>
    tpu.vector_store %arg8[%c0_11, %c0_12], %15 {strides = array<i32>} : memref<1x128xf32, #tpu.memory_space<vmem>>, vector<1x128xf32>,
    %c1_i32 = arith.constant 1 : i32
    %17 = arith.cmpi eq, %arg1, %c1_i32 : i32
    %18 = arith.extui %17 : i1 to i32
    %c0_i32_13 = arith.constant 0 : i32
    %19 = arith.cmpi ne, %18, %c0_i32_13 : i32
    scf.if %19 {
      %c0_14 = arith.constant 0 : index
      %c0_15 = arith.constant 0 : index
      %20 = vector.load %arg8[%c0_14, %c0_15] : memref<1x128xf32, #tpu.memory_space<vmem>>, vector<1x128xf32>
      %c0_16 = arith.constant 0 : index
      %c0_17 = arith.constant 0 : index
      %21 = vector.load %arg5[%c0_16, %c0_17] : memref<128x128xf32, #tpu.memory_space<vmem>>, vector<128x128xf32>
      %cst_18 = arith.constant dense<0.000000e+00> : vector<1x128xf32>
      %22 = tpu.matmul %20, %21, %cst_18 {dimension_numbers = #tpu.dot_dimension_numbers<[1], [0], [0], [1], [0, 0, 1, 1], [], []>} : vector<1x128xf32>, vector<128x128xf32>, vector<1x128xf32> -> vector<1x128xf32>
      %c0_19 = arith.constant 0 : index
      %c0_20 = arith.constant 0 : index
      %23 = vector.load %arg6[%c0_19, %c0_20] : memref<1x128xf32, #tpu.memory_space<vmem>>, vector<1x128xf32>
      %24 = arith.addf %22, %23 : vector<1x128xf32>
      %25 = vector.shape_cast %24 : vector<1x128xf32> to vector<1x1x128xf32>
      %26 = vector.shape_cast %25 : vector<1x1x128xf32> to vector<1x1x128xf32>
      %27 = vector.broadcast %26 : vector<1x1x128xf32> to vector<1x8x128xf32>
      %c0_21 = arith.constant 0 : index
      %c0_22 = arith.constant 0 : index
      %c0_23 = arith.constant 0 : index
      %28 = vector.load %arg7[%c0_21, %c0_22, %c0_23] : memref<1x8x128xf32, #tpu.memory_space<vmem>>, vector<1x8x128xf32>
      tpu.vector_store %arg7[%c0_21, %c0_22, %c0_23], %27 {strides = array<i32>} : memref<1x8x128xf32, #tpu.memory_space<vmem>>, vector<1x8x128xf32>,
    } else {
    }
    return
  }
  func.func @transform_0(%arg0: i32, %arg1: i32) -> (i32, i32, i32) {
    %c0_i32 = arith.constant 0 : i32
    %c0_i32_0 = arith.constant 0 : i32
    return %arg0, %arg1, %c0_i32 : i32, i32, i32
  }
  func.func @transform_1(%arg0: i32, %arg1: i32) -> (i32, i32) {
    %c0_i32 = arith.constant 0 : i32
    %c0_i32_0 = arith.constant 0 : i32
    %c0_i32_1 = arith.constant 0 : i32
    return %c0_i32, %c0_i32_0 : i32, i32
  }
  func.func @transform_2(%arg0: i32, %arg1: i32) -> (i32, i32) {
    %c0_i32 = arith.constant 0 : i32
    %c0_i32_0 = arith.constant 0 : i32
    %c0_i32_1 = arith.constant 0 : i32
    return %c0_i32, %c0_i32_0 : i32, i32
  }
  func.func @transform_3(%arg0: i32, %arg1: i32) -> (i32, i32) {
    %c0_i32 = arith.constant 0 : i32
    %c0_i32_0 = arith.constant 0 : i32
    %c0_i32_1 = arith.constant 0 : i32
    return %c0_i32, %c0_i32_0 : i32, i32
  }
  func.func @transform_4(%arg0: i32, %arg1: i32) -> (i32, i32) {
    %c0_i32 = arith.constant 0 : i32
    %c0_i32_0 = arith.constant 0 : i32
    %c0_i32_1 = arith.constant 0 : i32
    return %c0_i32, %c0_i32_0 : i32, i32
  }
  func.func @transform_5(%arg0: i32, %arg1: i32) -> (i32, i32, i32) {
    %c0_i32 = arith.constant 0 : i32
    %c0_i32_0 = arith.constant 0 : i32
    %c0_i32_1 = arith.constant 0 : i32
    return %arg0, %c0_i32, %c0_i32_0 : i32, i32, i32
  }
}

</mosaic_0001>

<llo_original>
// kernel: tpu_custom_call.1
$region0: #{tpu_custom_call.1}
  #allocation0 [shape = 'u32[]', space=smem, size = 0x4, offset = 0x4, fixed_abs, tag = 'smem constant byte address 0x4 - core index']
  #allocation1 [shape = 'u32[144,128]{1,0:T(1,128)}', space=vmem, size = 0x12000, scoped, tag = 'internal scratch']
  #allocation2 [shape = 'f32[1,128]{1,0:T(1,128)}', space=vmem, size = 0x200, scoped, tag = 'scratch operand']
  %s0 = inlined_call_operand.hbm [shape: f32[2,256,128], index: 0, kind: input, shape index: {}]
  %s1 = inlined_call_operand.hbm [shape: f32[128,128], index: 1, kind: input, shape index: {}]
  %s2 = inlined_call_operand.vmem [shape: f32[1,128], index: 2, kind: input, shape index: {}]
  %s3 = inlined_call_operand.hbm [shape: f32[128,128], index: 3, kind: input, shape index: {}]
  %s4 = inlined_call_operand.vmem [shape: f32[1,128], index: 4, kind: input, shape index: {}]
  %s5 = inlined_call_operand.hbm [shape: f32[2,8,128], index: 5, kind: output, shape index: {}]
  %s6 = sld [smem:[#allocation0]]
  $region73: #{tpu_custom_call.1} parent=0
    _
  %s8 = ssub.s32 1, %s6
  %s9 = scalar_select 0, %s8, %s6
  $region1: #{tpu_custom_call.1} parent=0
    #allocation3 [shape = 'u8[131072]{0}', space=vmem, size = 0x20000, scoped, tag = 'input window, operand 0']
    #allocation4 [shape = 's32[2]{0}', space=sflag, size = 0x8, scoped, tag = 'scoped memory for tpu_custom_call.1']
    #allocation5 [shape = 's32[2]{0}', space=sflag, size = 0x8, scoped, tag = 'scoped memory for tpu_custom_call.1']
    #allocation6 [shape = 'u8[65536]{0}', space=vmem, size = 0x10000, scoped, tag = 'input window, operand 1, single buffered']
    #allocation7 [shape = 's32[1]{0}', space=sflag, size = 0x4, scoped, tag = 'scoped memory for tpu_custom_call.1']
    #allocation8 [shape = 'u8[65536]{0}', space=vmem, size = 0x10000, scoped, tag = 'input window, operand 3, single buffered']
    #allocation9 [shape = 'u8[8192]{0}', space=vmem, size = 0x2000, scoped, tag = 'output window, operand 0']
    %10 = vsyncpa [#allocation4], 0
    %s11 = scalar_lea.sflag [#allocation4], 1
    %12 = vsyncpa %s11, 0
    %13 = vsyncpa [#allocation7], 0
    %14 = vsyncpa [#allocation5], 0
    %s15 = scalar_lea.sflag [#allocation5], 1
    %16 = vsyncpa %s15, 0
    loop: start=0, step=1, limit=6
    $region2: #{tpu_custom_call.1} parent=1 // loop_pre_header
      _
    $region3: #{tpu_custom_call.1} parent=1 // loop_header
      %s18 = sphi 0, %s22
      %p19 = scmp.ge.s32.totalorder %s18, 6
      %s25 = sphi 0, %s37
      %s26 = sphi 0, %s33
      %s27 = sphi 0, %s25
      %s28 = sphi 0, %s26
      %s29 = sphi 0, %s27
      %s30 = sphi 0, %s28
      %s42 = sphi 0, %s44
      %s45 = sphi 0, %s42
      %s46 = sphi 0, %s45
      %s62 = sphi 0, %s46
      %s66 = sphi 0, %s66
      %s68 = sphi 0, %s66
      %s69 = sphi 0, %s68
      %s83 = sphi 0, %s69
      %s87 = sphi 0, %s87
      %s89 = sphi 0, %s87
      %s90 = sphi 0, %s89
      %s104 = sphi 0, %s90
      %s108 = sphi 0, %s108
      %s110 = sphi 0, %s108
      %s111 = sphi 0, %s110
      %s125 = sphi 0, %s111
      %s129 = sphi 0, %s129
      %s131 = sphi 0, %s129
      %s132 = sphi 0, %s131
      %s146 = sphi 0, %s132
      %s152 = sphi 0, %s154
      %s155 = sphi 0, %s152
      %s156 = sphi 0, %s155
      %s172 = sphi 0, %s156
    $region4: #{tpu_custom_call.1} parent=1 // loop_header_branch
      %21 = sbr.rel (%p19) target = $region8
    $region5: #{tpu_custom_call.1} parent=1 // loop_body
      %s23 = ssub.s32 %s18, 1
      %s24 = ssub.s32 %s18, 2
      %s31 = sadd.s32 1, %s26
      %p32 = scmp.ge.s32.totalorder %s31, 2
      %s33 = scalar_select %p32, 0, %s31
      %s34 = sadd.s32 1, %s25
      %s35 = scalar_select %p32, %s34, %s25
      %p36 = scmp.ge.s32.totalorder %s35, 2
      %s37 = scalar_select %p36, 0, %s35
      %s38 = ssub.s32 %s25, %s37
      %s39 = ssub.s32 %s26, %s33
      %s40 = sor.u32 %s38, %s39
      %p41 = scmp.eq.s32.totalorder %s40, 0
      %s43 = sadd.s32 %s42, 1
      %s44 = scalar_select %p41, %s42, %s43
      %p47 = pneg %p41
      %p48 = scmp.eq.s32.totalorder %s18, 3
      %p49 = por %p47, %p48
      %p50 = scmp.ne.s32.totalorder %s42, %s45
      %p51 = scmp.eq.s32.totalorder %s18, 0
      %p52 = por %p50, %p51
      %p53 = scmp.ne.s32.totalorder %s42, %s45
      %p54 = scmp.eq.s32.totalorder %s23, 3
      %p55 = por %p53, %p54
      %p56 = scmp.ne.s32.totalorder %s45, %s46
      %p57 = scmp.eq.s32.totalorder %s23, 0
      %p58 = por %p56, %p57
      %p59 = scmp.ne.s32.totalorder %s45, %s46
      %p60 = scmp.eq.s32.totalorder %s24, 3
      %p61 = por %p59, %p60
      %p63 = scmp.ne.s32.totalorder %s46, %s62
      %p64 = scmp.eq.s32.totalorder %s24, 0
      %p65 = por %p63, %p64
      %s67 = sadd.s32 %s66, 1
      %p70 = scmp.eq.s32.totalorder %s18, 3
      %p71 = scmp.ne.s32.totalorder %s66, %s68
      %p72 = scmp.eq.s32.totalorder %s18, 0
      %p73 = por %p71, %p72
      %p74 = scmp.ne.s32.totalorder %s66, %s68
      %p75 = scmp.eq.s32.totalorder %s23, 3
      %p76 = por %p74, %p75
      %p77 = scmp.ne.s32.totalorder %s68, %s69
      %p78 = scmp.eq.s32.totalorder %s23, 0
      %p79 = por %p77, %p78
      %p80 = scmp.ne.s32.totalorder %s68, %s69
      %p81 = scmp.eq.s32.totalorder %s24, 3
      %p82 = por %p80, %p81
      %p84 = scmp.ne.s32.totalorder %s69, %s83
      %p85 = scmp.eq.s32.totalorder %s24, 0
      %p86 = por %p84, %p85
      %s88 = sadd.s32 %s87, 1
      %p91 = scmp.eq.s32.totalorder %s18, 3
      %p92 = scmp.ne.s32.totalorder %s87, %s89
      %p93 = scmp.eq.s32.totalorder %s18, 0
      %p94 = por %p92, %p93
      %p95 = scmp.ne.s32.totalorder %s87, %s89
      %p96 = scmp.eq.s32.totalorder %s23, 3
      %p97 = por %p95, %p96
      %p98 = scmp.ne.s32.totalorder %s89, %s90
      %p99 = scmp.eq.s32.totalorder %s23, 0
      %p100 = por %p98, %p99
      %p101 = scmp.ne.s32.totalorder %s89, %s90
      %p102 = scmp.eq.s32.totalorder %s24, 3
      %p103 = por %p101, %p102
      %p105 = scmp.ne.s32.totalorder %s90, %s104
      %p106 = scmp.eq.s32.totalorder %s24, 0
      %p107 = por %p105, %p106
      %s109 = sadd.s32 %s108, 1
      %p112 = scmp.eq.s32.totalorder %s18, 3
      %p113 = scmp.ne.s32.totalorder %s108, %s110
      %p114 = scmp.eq.s32.totalorder %s18, 0
      %p115 = por %p113, %p114
      %p116 = scmp.ne.s32.totalorder %s108, %s110
      %p117 = scmp.eq.s32.totalorder %s23, 3
      %p118 = por %p116, %p117
      %p119 = scmp.ne.s32.totalorder %s110, %s111
      %p120 = scmp.eq.s32.totalorder %s23, 0
      %p121 = por %p119, %p120
      %p122 = scmp.ne.s32.totalorder %s110, %s111
      %p123 = scmp.eq.s32.totalorder %s24, 3
      %p124 = por %p122, %p123
      %p126 = scmp.ne.s32.totalorder %s111, %s125
      %p127 = scmp.eq.s32.totalorder %s24, 0
      %p128 = por %p126, %p127
      %s130 = sadd.s32 %s129, 1
      %p133 = scmp.eq.s32.totalorder %s18, 3
      %p134 = scmp.ne.s32.totalorder %s129, %s131
      %p135 = scmp.eq.s32.totalorder %s18, 0
      %p136 = por %p134, %p135
      %p137 = scmp.ne.s32.totalorder %s129, %s131
      %p138 = scmp.eq.s32.totalorder %s23, 3
      %p139 = por %p137, %p138
      %p140 = scmp.ne.s32.totalorder %s131, %s132
      %p141 = scmp.eq.s32.totalorder %s23, 0
      %p142 = por %p140, %p141
      %p143 = scmp.ne.s32.totalorder %s131, %s132
      %p144 = scmp.eq.s32.totalorder %s24, 3
      %p145 = por %p143, %p144
      %p147 = scmp.ne.s32.totalorder %s132, %s146
      %p148 = scmp.eq.s32.totalorder %s24, 0
      %p149 = por %p147, %p148
      %s150 = ssub.s32 %s25, %s37
      %p151 = scmp.eq.s32.totalorder %s150, 0
      %s153 = sadd.s32 %s152, 1
      %s154 = scalar_select %p151, %s152, %s153
      %p157 = pneg %p151
      %p158 = scmp.eq.s32.totalorder %s18, 3
      %p159 = por %p157, %p158
      %p160 = scmp.ne.s32.totalorder %s152, %s155
      %p161 = scmp.eq.s32.totalorder %s18, 0
      %p162 = por %p160, %p161
      %p163 = scmp.ne.s32.totalorder %s152, %s155
      %p164 = scmp.eq.s32.totalorder %s23, 3
      %p165 = por %p163, %p164
      %p166 = scmp.ne.s32.totalorder %s155, %s156
      %p167 = scmp.eq.s32.totalorder %s23, 0
      %p168 = por %p166, %p167
      %p169 = scmp.ne.s32.totalorder %s155, %s156
      %p170 = scmp.eq.s32.totalorder %s24, 3
      %p171 = por %p169, %p170
      %p173 = scmp.ne.s32.totalorder %s156, %s172
      %p174 = scmp.eq.s32.totalorder %s24, 0
      %p175 = por %p173, %p174
      %p176 = scmp.le.s32.totalorder 1, %s18
      %p177 = scmp.lt.s32.totalorder %s18, 5
      %p178 = pnand %p176, %p177
      %p179 = pneg %p178
      // Predicated region
      $region9: #{tpu_custom_call.1} parent=5 // pred_check
        _
      $region10: #{tpu_custom_call.1} parent=5 // pred_check_branch
        %181 = sbr.rel (%p178) target = $region12
      $region11: #{tpu_custom_call.1} parent=5 // pred_region
        %s182 = ssub.s32 %s18, 1
        // Predicated region
        $region13: #{tpu_custom_call.1} parent=11 // pred_check
          %p183 = pneg %p79
        $region14: #{tpu_custom_call.1} parent=11 // pred_check_branch
          %185 = sbr.rel (%p183) target = $region16
        $region15: #{tpu_custom_call.1} parent=11 // pred_region
          %s187 = ssub.s32 2048, 2048
          %188 = vsyncadd [#allocation7], %s187
          %s189 = sshll.u32 [#allocation6], 4
          %s190 = int_to_ptr.vmem [resolvable:$true] %s189
          %195 = dma.hbm_to_vmem [thread:$0]  %s1, 2048, %s190, [#allocation7], 128, 128, 8
        $region16: #{tpu_custom_call.1} parent=11 // pred_fallthru
          _
        // Predicated region
        $region17: #{tpu_custom_call.1} parent=11 // pred_check
          %p196 = pneg %p100
        $region18: #{tpu_custom_call.1} parent=11 // pred_check_branch
          %198 = sbr.rel (%p196) target = $region20
        $region19: #{tpu_custom_call.1} parent=11 // pred_region
          _
        $region20: #{tpu_custom_call.1} parent=11 // pred_fallthru
          _
        // Predicated region
        $region21: #{tpu_custom_call.1} parent=11 // pred_check
          %p199 = pneg %p121
        $region22: #{tpu_custom_call.1} parent=11 // pred_check_branch
          %201 = sbr.rel (%p199) target = $region24
        $region23: #{tpu_custom_call.1} parent=11 // pred_region
          %s203 = ssub.s32 2048, 2048
          %204 = vsyncadd [#allocation7], %s203
          %s205 = sshll.u32 [#allocation8], 4
          %s206 = int_to_ptr.vmem [resolvable:$true] %s205
          %211 = dma.hbm_to_vmem [thread:$0]  %s3, 2048, %s206, [#allocation7], 128, 128, 8
        $region24: #{tpu_custom_call.1} parent=11 // pred_fallthru
          _
        // Predicated region
        $region25: #{tpu_custom_call.1} parent=11 // pred_check
          %p212 = pneg %p142
        $region26: #{tpu_custom_call.1} parent=11 // pred_check_branch
          %214 = sbr.rel (%p212) target = $region28
        $region27: #{tpu_custom_call.1} parent=11 // pred_region
          _
        $region28: #{tpu_custom_call.1} parent=11 // pred_fallthru
          _
      $region12: #{tpu_custom_call.1} parent=5 // pred_fallthru
        _
      %p215 = scmp.lt.s32.totalorder %s18, 4
      // Predicated region
      $region29: #{tpu_custom_call.1} parent=5 // pred_check
        %p216 = pneg %p215
      $region30: #{tpu_custom_call.1} parent=5 // pred_check_branch
        %218 = sbr.rel (%p216) target = $region32
      $region31: #{tpu_custom_call.1} parent=5 // pred_region
        // Predicated region
        $region33: #{tpu_custom_call.1} parent=31 // pred_check
          %p219 = pneg %p52
        $region34: #{tpu_custom_call.1} parent=31 // pred_check_branch
          %221 = sbr.rel (%p219) target = $region36
        $region35: #{tpu_custom_call.1} parent=31 // pred_region
          %s222 = sand.u32 %s42, 1
          %s223 = scalar_lea.sflag [#allocation4], %s222
          %s224 = sand.u32 %s42, 1
          %s225 = smul.addr %s224, 128
          %s226 = scalar_lea.vmem [#allocation3], %s225
          %s227 = smul.u32 16, %s26
          %s229 = ssub.s32 2048, 2048
          %230 = vsyncadd %s223, %s229
          %s231 = smul.addr %s25, 32
          %s232 = sadd.s32 %s227, %s231
          %s233 = smul.addr %s232, 128
          %s234 = scalar_lea.hbm %s0, %s233
          %s235 = sshll.u32 %s226, 4
          %s236 = int_to_ptr.vmem [resolvable:$true] %s235
          %241 = dma.hbm_to_vmem [thread:$0]  %s234, 2048, %s236, %s223, 128, 128, 8
        $region36: #{tpu_custom_call.1} parent=31 // pred_fallthru
          _
      $region32: #{tpu_custom_call.1} parent=5 // pred_fallthru
        _
      %p242 = scmp.le.s32.totalorder 1, %s18
      %p243 = scmp.lt.s32.totalorder %s18, 5
      %p244 = pnand %p242, %p243
      %p245 = pneg %p244
      // Predicated region
      $region37: #{tpu_custom_call.1} parent=5 // pred_check
        _
      $region38: #{tpu_custom_call.1} parent=5 // pred_check_branch
        %247 = sbr.rel (%p244) target = $region40
      $region39: #{tpu_custom_call.1} parent=5 // pred_region
        %s248 = ssub.s32 %s18, 1
        %s249 = sand.u32 %s45, 1
        %s250 = scalar_lea.sflag [#allocation4], %s249
        %s251 = sand.u32 %s45, 1
        %s252 = smul.addr %s251, 128
        %s253 = scalar_lea.vmem [#allocation3], %s252
        // Predicated region
        $region41: #{tpu_custom_call.1} parent=39 // pred_check
          %p254 = pneg %p58
        $region42: #{tpu_custom_call.1} parent=39 // pred_check_branch
          %256 = sbr.rel (%p254) target = $region44
        $region43: #{tpu_custom_call.1} parent=39 // pred_region
          %257 = dma.done %s250, 2048
        $region44: #{tpu_custom_call.1} parent=39 // pred_fallthru
          _
        // Predicated region
        $region45: #{tpu_custom_call.1} parent=39 // pred_check
          %p258 = pneg %p79
        $region46: #{tpu_custom_call.1} parent=39 // pred_check_branch
          %260 = sbr.rel (%p258) target = $region48
        $region47: #{tpu_custom_call.1} parent=39 // pred_region
          %261 = dma.done [#allocation7], 2048
        $region48: #{tpu_custom_call.1} parent=39 // pred_fallthru
          _
        // Predicated region
        $region49: #{tpu_custom_call.1} parent=39 // pred_check
          %p262 = pneg %p121
        $region50: #{tpu_custom_call.1} parent=39 // pred_check_branch
          %264 = sbr.rel (%p262) target = $region52
        $region51: #{tpu_custom_call.1} parent=39 // pred_region
          %265 = dma.done [#allocation7], 2048
        $region52: #{tpu_custom_call.1} parent=39 // pred_fallthru
          _
        %s266 = sand.u32 %s45, 1
        %s267 = scalar_lea.sflag [#allocation4], %s266
        %s268 = sand.u32 %s45, 1
        %s269 = smul.addr %s268, 128
        %s270 = scalar_lea.vmem [#allocation3], %s269
        %p271 = pneg %p58
        %p272 = pneg %p55
        %p273 = pneg %p79
        %p274 = pneg %p76
        %p275 = pneg %p100
        %p276 = pneg %p97
        %p277 = pneg %p121
        %p278 = pneg %p118
        %p279 = pneg %p142
        %p280 = pneg %p139
        %p281 = pneg %p168
        %p282 = pneg %p165
        %s283 = sand.u32 %s155, 1
        %s284 = scalar_lea.sflag [#allocation5], %s283
        %s285 = sand.u32 %s155, 1
        %s286 = smul.addr %s285, 8
        %s287 = scalar_lea.vmem [#allocation9], %s286
        %s288 = smul.u32 16, %s28
        %p289 = scmp.eq.s32.totalorder %s28, 0
        // Predicated region
        $region53: #{tpu_custom_call.1} parent=39 // pred_check
          %p290 = pneg %p289
        $region54: #{tpu_custom_call.1} parent=39 // pred_check_branch
          %292 = sbr.rel (%p290) target = $region56
        $region55: #{tpu_custom_call.1} parent=39 // pred_region
          %293 = vst [vmem:[#allocation2] sm:$0x1] 0.0
        $region56: #{tpu_custom_call.1} parent=39 // pred_fallthru
          _
        %v294 = vld [vmem:[%s253] sm:$0xff]
        %v295 = vld [vmem:[%s253 + $0x8] sm:$0xff]
        %v296 = vld [vmem:[%s253 + $0x10] sm:$0xff]
        %v297 = vld [vmem:[%s253 + $0x18] sm:$0xff]
        %v298 = vld [vmem:[%s253 + $0x20] sm:$0xff]
        %v299 = vld [vmem:[%s253 + $0x28] sm:$0xff]
        %v300 = vld [vmem:[%s253 + $0x30] sm:$0xff]
        %v301 = vld [vmem:[%s253 + $0x38] sm:$0xff]
        %v302 = vld [vmem:[%s253 + $0x40] sm:$0xff]
        %v303 = vld [vmem:[%s253 + $0x48] sm:$0xff]
        %v304 = vld [vmem:[%s253 + $0x50] sm:$0xff]
        %v305 = vld [vmem:[%s253 + $0x58] sm:$0xff]
        %v306 = vld [vmem:[%s253 + $0x60] sm:$0xff]
        %v307 = vld [vmem:[%s253 + $0x68] sm:$0xff]
        %v308 = vld [vmem:[%s253 + $0x70] sm:$0xff]
        %v309 = vld [vmem:[%s253 + $0x78] sm:$0xff]
        %v310 = vld [vmem:[#allocation6] sm:$0xff]
        %v311 = vld [vmem:[#allocation6 + $0x8] sm:$0xff]
        %v312 = vld [vmem:[#allocation6 + $0x10] sm:$0xff]
        %v313 = vld [vmem:[#allocation6 + $0x18] sm:$0xff]
        %v314 = vld [vmem:[#allocation6 + $0x20] sm:$0xff]
        %v315 = vld [vmem:[#allocation6 + $0x28] sm:$0xff]
        %v316 = vld [vmem:[#allocation6 + $0x30] sm:$0xff]
        %v317 = vld [vmem:[#allocation6 + $0x38] sm:$0xff]
        %v318 = vld [vmem:[#allocation6 + $0x40] sm:$0xff]
        %v319 = vld [vmem:[#allocation6 + $0x48] sm:$0xff]
        %v320 = vld [vmem:[#allocation6 + $0x50] sm:$0xff]
        %v321 = vld [vmem:[#allocation6 + $0x58] sm:$0xff]
        %v322 = vld [vmem:[#allocation6 + $0x60] sm:$0xff]
        %v323 = vld [vmem:[#allocation6 + $0x68] sm:$0xff]
        %v324 = vld [vmem:[#allocation6 + $0x70] sm:$0xff]
        %v325 = vld [vmem:[#allocation6 + $0x78] sm:$0xff]
        %v326 = vld [vmem:[%s2] sm:$0x1]
        %v328 = vlaneseq
        %v329 = vshrl.u32 %v328, 7
        %v330 = vsub.s32 0, %v329
        %v331 = vrot.slane %v326, %v330
        %333 = vmatprep.subr.mxu0 0.0
        %334 = vmatpush1.msra.mxu0 %v310
        %335 = vmatprep.subr.mxu0 0.0
        %336 = vmatpush1.msra.mxu0 %v311
        %337 = vmatprep.subr.mxu0 0.0
        %338 = vmatpush1.msra.mxu0 %v312
        %339 = vmatprep.subr.mxu0 0.0
        %340 = vmatpush1.msra.mxu0 %v313
        %341 = vmatprep.subr.mxu0 0.0
        %342 = vmatpush1.msra.mxu0 %v314
        %343 = vmatprep.subr.mxu0 0.0
        %344 = vmatpush1.msra.mxu0 %v315
        %345 = vmatprep.subr.mxu0 0.0
        %346 = vmatpush1.msra.mxu0 %v316
        %347 = vmatprep.subr.mxu0 0.0
        %348 = vmatpush1.msra.mxu0 %v317
        %349 = vmatprep.subr.mxu0 0.0
        %350 = vmatpush1.msra.mxu0 %v318
        %351 = vmatprep.subr.mxu0 0.0
        %352 = vmatpush1.msra.mxu0 %v319
        %353 = vmatprep.subr.mxu0 0.0
        %354 = vmatpush1.msra.mxu0 %v320
        %355 = vmatprep.subr.mxu0 0.0
        %356 = vmatpush1.msra.mxu0 %v321
        %357 = vmatprep.subr.mxu0 0.0
        %358 = vmatpush1.msra.mxu0 %v322
        %359 = vmatprep.subr.mxu0 0.0
        %360 = vmatpush1.msra.mxu0 %v323
        %361 = vmatprep.subr.mxu0 0.0
        %362 = vmatpush1.msra.mxu0 %v324
        %363 = vmatprep.subr.mxu0 0.0
        %364 = vmatpush1.msra.mxu0 %v325
        %365 = vmatprep.subr.mxu0 0.0
        %366 = vmatpush1.msra.mxu0 0.0
        %367 = vmatprep.subr.mxu0 0.0
        %368 = vmatpush1.msra.mxu0 0.0
        %369 = vmatprep.subr.mxu0 0.0
        %370 = vmatpush1.msra.mxu0 0.0
        %371 = vmatprep.subr.mxu0 0.0
        %372 = vmatpush1.msra.mxu0 0.0
        %373 = vmatprep.subr.mxu0 0.0
        %374 = vmatpush1.msra.mxu0 0.0
        %375 = vmatprep.subr.mxu0 0.0
        %376 = vmatpush1.msra.mxu0 0.0
        %377 = vmatprep.subr.mxu0 0.0
        %378 = vmatpush1.msra.mxu0 0.0
        %379 = vmatprep.subr.mxu0 0.0
        %380 = vmatpush1.msra.mxu0 0.0
        %381 = vmatprep.subr.mxu0 0.0
        %382 = vmatpush1.msra.mxu0 0.0
        %383 = vmatprep.subr.mxu0 0.0
        %384 = vmatpush1.msra.mxu0 0.0
        %385 = vmatprep.subr.mxu0 0.0
        %386 = vmatpush1.msra.mxu0 0.0
        %387 = vmatprep.subr.mxu0 0.0
        %388 = vmatpush1.msra.mxu0 0.0
        %389 = vmatprep.subr.mxu0 0.0
        %390 = vmatpush1.msra.mxu0 0.0
        %391 = vmatprep.subr.mxu0 0.0
        %392 = vmatpush1.msra.mxu0 0.0
        %393 = vmatprep.subr.mxu0 0.0
        %394 = vmatpush1.msra.mxu0 0.0
        %395 = vmatprep.subr.mxu0 0.0
        %396 = vmatpush1.msra.mxu0 0.0
        %397 = vmatprep.mubr.f32.mxu0 0.0
        %398 = vmatmul.mubr.f32.gmra.mrb[0].mxu0 %v294
        %v399 = vpop.f32.mrb[0].mxu0
        %v400 = vadd.f32 %v331, %v399
        %v401 = vpop.f32.mrb[0].mxu0
        %402 = vmatprep.mubr.f32.mxu0 0.0
        %403 = vmatmul.mubr.f32.gmra.mrb[0].mxu0 %v295
        %v404 = vpop.f32.mrb[0].mxu0
        %v405 = vadd.f32 %v331, %v404
        %v406 = vpop.f32.mrb[0].mxu0
        %407 = vmatprep.mubr.f32.mxu0 0.0
        %408 = vmatmul.mubr.f32.gmra.mrb[0].mxu0 %v296
        %v409 = vpop.f32.mrb[0].mxu0
        %v410 = vadd.f32 %v331, %v409
        %v411 = vpop.f32.mrb[0].mxu0
        %412 = vmatprep.mubr.f32.mxu0 0.0
        %413 = vmatmul.mubr.f32.gmra.mrb[0].mxu0 %v297
        %v414 = vpop.f32.mrb[0].mxu0
        %v415 = vadd.f32 %v331, %v414
        %v416 = vpop.f32.mrb[0].mxu0
        %417 = vmatprep.mubr.f32.mxu0 0.0
        %418 = vmatmul.mubr.f32.gmra.mrb[0].mxu0 %v298
        %v419 = vpop.f32.mrb[0].mxu0
        %v420 = vadd.f32 %v331, %v419
        %v421 = vpop.f32.mrb[0].mxu0
        %422 = vmatprep.mubr.f32.mxu0 0.0
        %423 = vmatmul.mubr.f32.gmra.mrb[0].mxu0 %v299
        %v424 = vpop.f32.mrb[0].mxu0
        %v425 = vadd.f32 %v331, %v424
        %v426 = vpop.f32.mrb[0].mxu0
        %427 = vmatprep.mubr.f32.mxu0 0.0
        %428 = vmatmul.mubr.f32.gmra.mrb[0].mxu0 %v300
        %v429 = vpop.f32.mrb[0].mxu0
        %v430 = vadd.f32 %v331, %v429
        %v431 = vpop.f32.mrb[0].mxu0
        %432 = vmatprep.mubr.f32.mxu0 0.0
        %433 = vmatmul.mubr.f32.gmra.mrb[0].mxu0 %v301
        %v434 = vpop.f32.mrb[0].mxu0
        %v435 = vadd.f32 %v331, %v434
        %v436 = vpop.f32.mrb[0].mxu0
        %437 = vmatprep.mubr.f32.mxu0 0.0
        %438 = vmatmul.mubr.f32.gmra.mrb[0].mxu0 %v302
        %v439 = vpop.f32.mrb[0].mxu0
        %v440 = vadd.f32 %v331, %v439
        %v441 = vpop.f32.mrb[0].mxu0
        %442 = vmatprep.mubr.f32.mxu0 0.0
        %443 = vmatmul.mubr.f32.gmra.mrb[0].mxu0 %v303
        %v444 = vpop.f32.mrb[0].mxu0
        %v445 = vadd.f32 %v331, %v444
        %v446 = vpop.f32.mrb[0].mxu0
        %447 = vmatprep.mubr.f32.mxu0 0.0
        %448 = vmatmul.mubr.f32.gmra.mrb[0].mxu0 %v304
        %v449 = vpop.f32.mrb[0].mxu0
        %v450 = vadd.f32 %v331, %v449
        %v451 = vpop.f32.mrb[0].mxu0
        %452 = vmatprep.mubr.f32.mxu0 0.0
        %453 = vmatmul.mubr.f32.gmra.mrb[0].mxu0 %v305
        %v454 = vpop.f32.mrb[0].mxu0
        %v455 = vadd.f32 %v331, %v454
        %v456 = vpop.f32.mrb[0].mxu0
        %457 = vmatprep.mubr.f32.mxu0 0.0
        %458 = vmatmul.mubr.f32.gmra.mrb[0].mxu0 %v306
        %v459 = vpop.f32.mrb[0].mxu0
        %v460 = vadd.f32 %v331, %v459
        %v461 = vpop.f32.mrb[0].mxu0
        %462 = vmatprep.mubr.f32.mxu0 0.0
        %463 = vmatmul.mubr.f32.gmra.mrb[0].mxu0 %v307
        %v464 = vpop.f32.mrb[0].mxu0
        %v465 = vadd.f32 %v331, %v464
        %v466 = vpop.f32.mrb[0].mxu0
        %467 = vmatprep.mubr.f32.mxu0 0.0
        %468 = vmatmul.mubr.f32.gmra.mrb[0].mxu0 %v308
        %v469 = vpop.f32.mrb[0].mxu0
        %v470 = vadd.f32 %v331, %v469
        %v471 = vpop.f32.mrb[0].mxu0
        %472 = vmatprep.mubr.f32.mxu0 0.0
        %473 = vmatmul.mubr.f32.gmra.mrb[0].mxu0 %v309
        %v474 = vpop.f32.mrb[0].mxu0
        %v475 = vadd.f32 %v331, %v474
        %v476 = vpop.f32.mrb[0].mxu0
        %477 = vdwg.mxu0
        %v478 = vmax.f32 %v400, 0.0
        %v479 = vmax.f32 %v405, 0.0
        %v480 = vmax.f32 %v410, 0.0
        %v481 = vmax.f32 %v415, 0.0
        %v482 = vmax.f32 %v420, 0.0
        %v483 = vmax.f32 %v425, 0.0
        %v484 = vmax.f32 %v430, 0.0
        %v485 = vmax.f32 %v435, 0.0
        %v486 = vmax.f32 %v440, 0.0
        %v487 = vmax.f32 %v445, 0.0
        %v488 = vmax.f32 %v450, 0.0
        %v489 = vmax.f32 %v455, 0.0
        %v490 = vmax.f32 %v460, 0.0
        %v491 = vmax.f32 %v465, 0.0
        %v492 = vmax.f32 %v470, 0.0
        %v493 = vmax.f32 %v475, 0.0
        %v494 = vld [vmem:[#allocation2] sm:$0x1]
        %v495 = vadd.f32 %v478, %v479
        %v496 = vadd.f32 %v495, %v480
        %v497 = vadd.f32 %v496, %v481
        %v498 = vadd.f32 %v497, %v482
        %v499 = vadd.f32 %v498, %v483
        %v500 = vadd.f32 %v499, %v484
        %v501 = vadd.f32 %v500, %v485
        %v502 = vadd.f32 %v501, %v486
        %v503 = vadd.f32 %v502, %v487
        %v504 = vadd.f32 %v503, %v488
        %v505 = vadd.f32 %v504, %v489
        %v506 = vadd.f32 %v505, %v490
        %v507 = vadd.f32 %v506, %v491
        %v508 = vadd.f32 %v507, %v492
        %v509 = vadd.f32 %v508, %v493
        %v510 = vrot.slane %v509, 4
        %v511 = vadd.f32 %v509, %v510
        %v512 = vrot.slane %v511, 2
        %v513 = vadd.f32 %v511, %v512
        %v514 = vrot.slane %v513, 1
        %v515 = vadd.f32 %v513, %v514
        %v516 = vadd.f32 %v494, %v515
        %517 = vst [vmem:[#allocation2] sm:$0x1] %v516
        %p518 = scmp.eq.s32.totalorder %s28, 1
        // Predicated region
        $region57: #{tpu_custom_call.1} parent=39 // pred_check
          %p519 = pneg %p518
        $region58: #{tpu_custom_call.1} parent=39 // pred_check_branch
          %521 = sbr.rel (%p519) target = $region60
        $region59: #{tpu_custom_call.1} parent=39 // pred_region
          %v522 = vld [vmem:[#allocation2] sm:$0x1]
          %v523 = vld [vmem:[#allocation8] sm:$0xff]
          %v524 = vld [vmem:[#allocation8 + $0x8] sm:$0xff]
          %v525 = vld [vmem:[#allocation8 + $0x10] sm:$0xff]
          %v526 = vld [vmem:[#allocation8 + $0x18] sm:$0xff]
          %v527 = vld [vmem:[#allocation8 + $0x20] sm:$0xff]
          %v528 = vld [vmem:[#allocation8 + $0x28] sm:$0xff]
          %v529 = vld [vmem:[#allocation8 + $0x30] sm:$0xff]
          %v530 = vld [vmem:[#allocation8 + $0x38] sm:$0xff]
          %v531 = vld [vmem:[#allocation8 + $0x40] sm:$0xff]
          %v532 = vld [vmem:[#allocation8 + $0x48] sm:$0xff]
          %v533 = vld [vmem:[#allocation8 + $0x50] sm:$0xff]
          %v534 = vld [vmem:[#allocation8 + $0x58] sm:$0xff]
          %v535 = vld [vmem:[#allocation8 + $0x60] sm:$0xff]
          %v536 = vld [vmem:[#allocation8 + $0x68] sm:$0xff]
          %v537 = vld [vmem:[#allocation8 + $0x70] sm:$0xff]
          %v538 = vld [vmem:[#allocation8 + $0x78] sm:$0xff]
          %v539 = vld [vmem:[%s4] sm:$0x1]
          %540 = vmatprep.subr.mxu0 0.0
          %541 = vmatpush1.msra.mxu0 %v523
          %542 = vmatprep.subr.mxu0 0.0
          %543 = vmatpush1.msra.mxu0 %v524
          %544 = vmatprep.subr.mxu0 0.0
          %545 = vmatpush1.msra.mxu0 %v525
          %546 = vmatprep.subr.mxu0 0.0
          %547 = vmatpush1.msra.mxu0 %v526
          %548 = vmatprep.subr.mxu0 0.0
          %549 = vmatpush1.msra.mxu0 %v527
          %550 = vmatprep.subr.mxu0 0.0
          %551 = vmatpush1.msra.mxu0 %v528
          %552 = vmatprep.subr.mxu0 0.0
          %553 = vmatpush1.msra.mxu0 %v529
          %554 = vmatprep.subr.mxu0 0.0
          %555 = vmatpush1.msra.mxu0 %v530
          %556 = vmatprep.subr.mxu0 0.0
          %557 = vmatpush1.msra.mxu0 %v531
          %558 = vmatprep.subr.mxu0 0.0
          %559 = vmatpush1.msra.mxu0 %v532
          %560 = vmatprep.subr.mxu0 0.0
          %561 = vmatpush1.msra.mxu0 %v533
          %562 = vmatprep.subr.mxu0 0.0
          %563 = vmatpush1.msra.mxu0 %v534
          %564 = vmatprep.subr.mxu0 0.0
          %565 = vmatpush1.msra.mxu0 %v535
          %566 = vmatprep.subr.mxu0 0.0
          %567 = vmatpush1.msra.mxu0 %v536
          %568 = vmatprep.subr.mxu0 0.0
          %569 = vmatpush1.msra.mxu0 %v537
          %570 = vmatprep.subr.mxu0 0.0
          %571 = vmatpush1.msra.mxu0 %v538
          %572 = vmatprep.subr.mxu0 0.0
          %573 = vmatpush1.msra.mxu0 0.0
          %574 = vmatprep.subr.mxu0 0.0
          %575 = vmatpush1.msra.mxu0 0.0
          %576 = vmatprep.subr.mxu0 0.0
          %577 = vmatpush1.msra.mxu0 0.0
          %578 = vmatprep.subr.mxu0 0.0
          %579 = vmatpush1.msra.mxu0 0.0
          %580 = vmatprep.subr.mxu0 0.0
          %581 = vmatpush1.msra.mxu0 0.0
          %582 = vmatprep.subr.mxu0 0.0
          %583 = vmatpush1.msra.mxu0 0.0
          %584 = vmatprep.subr.mxu0 0.0
          %585 = vmatpush1.msra.mxu0 0.0
          %586 = vmatprep.subr.mxu0 0.0
          %587 = vmatpush1.msra.mxu0 0.0
          %588 = vmatprep.subr.mxu0 0.0
          %589 = vmatpush1.msra.mxu0 0.0
          %590 = vmatprep.subr.mxu0 0.0
          %591 = vmatpush1.msra.mxu0 0.0
          %592 = vmatprep.subr.mxu0 0.0
          %593 = vmatpush1.msra.mxu0 0.0
          %594 = vmatprep.subr.mxu0 0.0
          %595 = vmatpush1.msra.mxu0 0.0
          %596 = vmatprep.subr.mxu0 0.0
          %597 = vmatpush1.msra.mxu0 0.0
          %598 = vmatprep.subr.mxu0 0.0
          %599 = vmatpush1.msra.mxu0 0.0
          %600 = vmatprep.subr.mxu0 0.0
          %601 = vmatpush1.msra.mxu0 0.0
          %602 = vmatprep.subr.mxu0 0.0
          %603 = vmatpush1.msra.mxu0 0.0
          %604 = vmatprep.mubr.f32.mxu0 0.0
          %605 = vmatmul.mubr.f32.gmra.mrb[0].mxu0 %v522
          %v606 = vpop.f32.mrb[0].mxu0
          %v607 = vadd.f32 %v539, %v606
          %v608 = vpop.f32.mrb[0].mxu0
          %609 = vdwg.mxu0
          %v610 = vlaneseq
          %v611 = vshrl.u32 %v610, 7
          %v612 = vsub.s32 0, %v611
          %v613 = vrot.slane %v607, %v612
          %614 = vst [vmem:[%s287] sm:$0xff] %v613
        $region60: #{tpu_custom_call.1} parent=39 // pred_fallthru
          _
        %s615 = sand.u32 %s155, 1
        %s616 = scalar_lea.sflag [#allocation5], %s615
        %s617 = sand.u32 %s155, 1
        %s618 = smul.addr %s617, 8
        %s619 = scalar_lea.vmem [#allocation9], %s618
        // Predicated region
        $region61: #{tpu_custom_call.1} parent=39 // pred_check
          %p620 = pneg %p165
        $region62: #{tpu_custom_call.1} parent=39 // pred_check_branch
          %622 = sbr.rel (%p620) target = $region64
        $region63: #{tpu_custom_call.1} parent=39 // pred_region
          %s624 = ssub.s32 128, 128
          %625 = vsyncadd %s616, %s624
          %s626 = smul.addr %s27, 128
          %s627 = scalar_lea.hbm %s5, %s626
          %s629 = sshll.u32 %s619, 4
          %s630 = int_to_ptr.vmem [resolvable:$true] %s629
          %632 = dma.vmem_to_hbm [thread:$0]  %s630, 128, %s627, %s616
        $region64: #{tpu_custom_call.1} parent=39 // pred_fallthru
          _
      $region40: #{tpu_custom_call.1} parent=5 // pred_fallthru
        _
      %p633 = scmp.le.s32.totalorder 2, %s18
      // Predicated region
      $region65: #{tpu_custom_call.1} parent=5 // pred_check
        %p634 = pneg %p633
      $region66: #{tpu_custom_call.1} parent=5 // pred_check_branch
        %636 = sbr.rel (%p634) target = $region68
      $region67: #{tpu_custom_call.1} parent=5 // pred_region
        %s637 = ssub.s32 %s18, 2
        // Predicated region
        $region69: #{tpu_custom_call.1} parent=67 // pred_check
          %p638 = pneg %p171
        $region70: #{tpu_custom_call.1} parent=67 // pred_check_branch
          %640 = sbr.rel (%p638) target = $region72
        $region71: #{tpu_custom_call.1} parent=67 // pred_region
          %s641 = sand.u32 %s156, 1
          %s642 = scalar_lea.sflag [#allocation5], %s641
          %s643 = sand.u32 %s156, 1
          %s644 = smul.addr %s643, 8
          %s645 = scalar_lea.vmem [#allocation9], %s644
          %646 = dma.done %s642, 128
        $region72: #{tpu_custom_call.1} parent=67 // pred_fallthru
          _
      $region68: #{tpu_custom_call.1} parent=5 // pred_fallthru
        _
    $region6: #{tpu_custom_call.1} parent=1 // loop_footer
      %s22 = sadd.s32 1, %s18
    $region7: #{tpu_custom_call.1} parent=1 // loop_footer_branch
      %17 = sbr.rel target = $region3
    $region8: #{tpu_custom_call.1} parent=1 // loop_exit
      _
    %647 = vsyncpa [#allocation4], 1
    %s648 = scalar_lea.sflag [#allocation4], 1
    %649 = vsyncpa %s648, 1
    %650 = vsyncpa [#allocation7], 1
    %651 = vsyncpa [#allocation5], 1
    %s652 = scalar_lea.sflag [#allocation5], 1
    %653 = vsyncpa %s652, 1

</llo_original>
